<compile_context>
chip_gen: v5e
topology: v5e:2x2
jax: 0.10.0
libtpu: 0.0.40
codegen_flags: <defaults>
</compile_context>

<pallas_src>
import functools

import jax
import jax.numpy as jnp
import numpy as np
from jax.experimental import pallas as pl
from jax.experimental.pallas import tpu as pltpu

GRID_SIZE = 20  # module default -> N = 400 grid points


def _gram_constants(grid_size):
    """Trace-time scalars of G = sum_n p~_n p~_n^T over the homogeneous grid points."""
    axis = np.linspace(-1.0, 1.0, grid_size)
    X, Y = np.meshgrid(axis, axis)                 # identical to the torch module
    px = X.ravel().astype(np.float64)
    py = Y.ravel().astype(np.float64)
    return (float(np.dot(px, px)),                 # Gxx = sum px^2
            float(np.dot(py, py)),                 # Gyy = sum py^2
            float(np.sum(px)),                     # Gx  = sum px   (0 for this grid)
            float(np.sum(py)),                     # Gy  = sum py   (0 for this grid)
            float(px.size))                        # N


def _seq_grid_loss_kernel(th_ref, tg_ref, o_ref, *, gxx, gyy, gx, gy, n):
    # th_ref: (B, 3) VMEM  predicted theta      [angle_deg, scale, y_shift]
    # tg_ref: (B, 3) VMEM  ground-truth theta
    # o_ref : (3,)   SMEM  [loss_rotate, loss_scale, loss_shift]
    #
    # sum_n ||dM p~_n||^2 = tr(dM G dM^T) with dM the (2,3) composed affine diff:
    #   stage 1: dM1 = [[a1,-d1,0],[d1,a1,0]],  a1 = c-cg, d1 = s-sg
    #   stage 2: dM2 = [[a2,-d2,0],[d2,a2,0]],  a2 = sc*c-scg*cg, d2 = sc*s-scg*sg
    #   stage 3: dM3 = [[a2,-d2,0],[d2,a2,dt]], dt = ty-tyg
    b = th_ref.shape[0]
    th = th_ref[...]                               # (B, 3) single tiny load
    tg = tg_ref[...]                               # (B, 3)

    # cos/sin of the 2B angles on the EUP (own VLIW slot -> effectively free).
    ang_p = th[:, 0:1] / 180.0 * float(np.pi)      # (B, 1)
    ang_g = tg[:, 0:1] / 180.0 * float(np.pi)
    c, s = jnp.cos(ang_p), jnp.sin(ang_p)
    cg, sg = jnp.cos(ang_g), jnp.sin(ang_g)

    sc, ty = th[:, 1:2], th[:, 2:3]                # pred scale, y-shift
    scg, tyg = tg[:, 1:2], tg[:, 2:3]              # GT   scale, y-shift

    a1 = c - cg
    d1 = s - sg
    a2 = sc * c - scg * cg
    d2 = sc * s - scg * sg
    dt = ty - tyg

    gsum = gxx + gyy
    q1 = (a1 * a1 + d1 * d1) * gsum                              # (B,1) tr(dM1 G dM1^T)
    q2 = (a2 * a2 + d2 * d2) * gsum                              # (B,1) tr(dM2 G dM2^T)
    q3 = q2 + (dt * dt) * n + 2.0 * dt * (d2 * gx + a2 * gy)     # (B,1) tr(dM3 G dM3^T)

    inv = 1.0 / (float(b) * n)
    o_ref[0] = jnp.sum(q1) * inv
    o_ref[1] = jnp.sum(q2) * inv
    o_ref[2] = jnp.sum(q3) * inv


@functools.partial(jax.jit, static_argnames=("grid_size",))
def sequential_grid_loss(theta, theta_gt, grid_size=GRID_SIZE):
    gxx, gyy, gx, gy, n = _gram_constants(grid_size)
    kernel = functools.partial(
        _seq_grid_loss_kernel, gxx=gxx, gyy=gyy, gx=gx, gy=gy, n=n)
    batch = theta.shape[0]
    losses = pl.pallas_call(
        kernel,
        out_shape=jax.ShapeDtypeStruct((3,), jnp.float32),
        in_specs=[
            pl.BlockSpec(memory_space=pltpu.MemorySpace.VMEM),
            pl.BlockSpec(memory_space=pltpu.MemorySpace.VMEM),
        ],
        out_specs=pl.BlockSpec(memory_space=pltpu.MemorySpace.SMEM),
        cost_estimate=pl.CostEstimate(
            flops=64 * batch,
            transcendentals=4 * batch,
            bytes_accessed=2 * batch * 3 * 4 + 3 * 4),
    )(theta.astype(jnp.float32), theta_gt.astype(jnp.float32))
    return losses[0], losses[1], losses[2]


# ----------------------- pure-JAX reference (verification) -----------------------

def _grid_points(grid_size):
    axis = np.linspace(-1.0, 1.0, grid_size)
    X, Y = np.meshgrid(axis, axis)
    return jnp.asarray(np.stack([X.ravel(), Y.ravel()], axis=0), dtype=jnp.float32)


def _reference(theta, theta_gt):
    # Full N-wide replica of the PyTorch forward (independent of the Gram algebra).
    B = theta.shape[0]
    P = _grid_points(GRID_SIZE)[None].repeat(B, axis=0)        # (B, 2, N)

    def aff(mat6, pts):
        m = mat6.reshape(B, 2, 3)
        return jnp.einsum("bij,bjn->bin", m[:, :, :2], pts) + m[:, :, 2][..., None]

    def rot(t):
        a = t / 180.0 * jnp.pi
        z = jnp.zeros_like(t)
        return jnp.stack([jnp.cos(a), -jnp.sin(a), z, jnp.sin(a), jnp.cos(a), z], axis=1)

    def scl(t):
        z = jnp.zeros_like(t)
        return jnp.stack([t, z, z, z, t, z], axis=1)

    def sfy(t):
        z = jnp.zeros_like(t)
        o = jnp.ones_like(t)
        return jnp.stack([o, z, z, z, o, t], axis=1)

    def wm(m, mg, p, pg):
        pw, pwg = aff(m, p), aff(mg, pg)
        return jnp.mean(jnp.sum((pw - pwg) ** 2, axis=1)), pw, pwg

    l1, p1, g1 = wm(rot(theta[:, 0]), rot(theta_gt[:, 0]), P, P)
    l2, p2, g2 = wm(scl(theta[:, 1]), scl(theta_gt[:, 1]), p1, g1)
    l3, _, _ = wm(sfy(theta[:, 2]), sfy(theta_gt[:, 2]), p2, g2)
    return l1, l2, l3


if __name__ == "__main__":
    key = jax.random.PRNGKey(0)
    k1, k2 = jax.random.split(key)
    batch = 2
    # theta[:,0]=angle(deg), theta[:,1]=scale, theta[:,2]=y-shift
    theta = jnp.stack(
        [
            jax.random.normal(k1, (batch,)) * 30.0,
            1.0 + 0.2 * jax.random.normal(k1, (batch,)),
            0.1 * jax.random.normal(k1, (batch,)),
        ],
        axis=1,
    ).astype(jnp.float32)
    theta_gt = jnp.stack(
        [
            jax.random.normal(k2, (batch,)) * 30.0,
            1.0 + 0.2 * jax.random.normal(k2, (batch,)),
            0.1 * jax.random.normal(k2, (batch,)),
        ],
        axis=1,
    ).astype(jnp.float32)

    out = sequential_grid_loss(theta, theta_gt)
    out = jax.block_until_ready(out)

    ref = _reference(theta, theta_gt)
    for o, r in zip(out, ref):
        np.testing.assert_allclose(np.asarray(o), np.asarray(r), rtol=5e-4, atol=1e-5)

    print("KERNEL_OK")
</pallas_src>

<mosaic_0001>
module attributes {stable_mosaic.version = 11 : i64} {
  func.func @_seq_grid_loss_kernel(%arg0: memref<2x3xf32, #tpu.memory_space<vmem>>, %arg1: memref<2x3xf32, #tpu.memory_space<vmem>>, %arg2: memref<3xf32, #tpu.memory_space<smem>>) attributes {dimension_semantics = [], scalar_prefetch = 0 : i64, scratch_operands = 0 : i64, tpu.core_type = #tpu.core_type<tc>} {
    %c0 = arith.constant 0 : index
    %c0_0 = arith.constant 0 : index
    %0 = vector.load %arg0[%c0, %c0_0] : memref<2x3xf32, #tpu.memory_space<vmem>>, vector<2x3xf32>
    %c0_1 = arith.constant 0 : index
    %c0_2 = arith.constant 0 : index
    %1 = vector.load %arg1[%c0_1, %c0_2] : memref<2x3xf32, #tpu.memory_space<vmem>>, vector<2x3xf32>
    %2 = vector.extract_strided_slice %0 {offsets = [0, 0], sizes = [2, 1], strides = [1, 1]} : vector<2x3xf32> to vector<2x1xf32>
    %cst = arith.constant 1.800000e+02 : f32
    %3 = vector.broadcast %cst : f32 to vector<2x1xf32>
    %4 = arith.divf %2, %3 : vector<2x1xf32>
    %cst_3 = arith.constant 3.14159274 : f32
    %5 = vector.broadcast %cst_3 : f32 to vector<2x1xf32>
    %6 = arith.mulf %4, %5 : vector<2x1xf32>
    %7 = vector.extract_strided_slice %1 {offsets = [0, 0], sizes = [2, 1], strides = [1, 1]} : vector<2x3xf32> to vector<2x1xf32>
    %cst_4 = arith.constant 1.800000e+02 : f32
    %8 = vector.broadcast %cst_4 : f32 to vector<2x1xf32>
    %9 = arith.divf %7, %8 : vector<2x1xf32>
    %cst_5 = arith.constant 3.14159274 : f32
    %10 = vector.broadcast %cst_5 : f32 to vector<2x1xf32>
    %11 = arith.mulf %9, %10 : vector<2x1xf32>
    %12 = math.cos %6 : vector<2x1xf32>
    %13 = math.sin %6 : vector<2x1xf32>
    %14 = math.cos %11 : vector<2x1xf32>
    %15 = math.sin %11 : vector<2x1xf32>
    %16 = vector.extract_strided_slice %0 {offsets = [0, 1], sizes = [2, 1], strides = [1, 1]} : vector<2x3xf32> to vector<2x1xf32>
    %17 = vector.extract_strided_slice %0 {offsets = [0, 2], sizes = [2, 1], strides = [1, 1]} : vector<2x3xf32> to vector<2x1xf32>
    %18 = vector.extract_strided_slice %1 {offsets = [0, 1], sizes = [2, 1], strides = [1, 1]} : vector<2x3xf32> to vector<2x1xf32>
    %19 = vector.extract_strided_slice %1 {offsets = [0, 2], sizes = [2, 1], strides = [1, 1]} : vector<2x3xf32> to vector<2x1xf32>
    %20 = arith.subf %12, %14 : vector<2x1xf32>
    %21 = arith.subf %13, %15 : vector<2x1xf32>
    %22 = arith.mulf %16, %12 : vector<2x1xf32>
    %23 = arith.mulf %18, %14 : vector<2x1xf32>
    %24 = arith.subf %22, %23 : vector<2x1xf32>
    %25 = arith.mulf %16, %13 : vector<2x1xf32>
    %26 = arith.mulf %18, %15 : vector<2x1xf32>
    %27 = arith.subf %25, %26 : vector<2x1xf32>
    %28 = arith.subf %17, %19 : vector<2x1xf32>
    %29 = arith.mulf %20, %20 : vector<2x1xf32>
    %30 = arith.mulf %21, %21 : vector<2x1xf32>
    %31 = arith.addf %29, %30 : vector<2x1xf32>
    %cst_6 = arith.constant 294.736847 : f32
    %32 = vector.broadcast %cst_6 : f32 to vector<2x1xf32>
    %33 = arith.mulf %31, %32 : vector<2x1xf32>
    %34 = arith.mulf %24, %24 : vector<2x1xf32>
    %35 = arith.mulf %27, %27 : vector<2x1xf32>
    %36 = arith.addf %34, %35 : vector<2x1xf32>
    %cst_7 = arith.constant 294.736847 : f32
    %37 = vector.broadcast %cst_7 : f32 to vector<2x1xf32>
    %38 = arith.mulf %36, %37 : vector<2x1xf32>
    %39 = arith.mulf %28, %28 : vector<2x1xf32>
    %cst_8 = arith.constant 4.000000e+02 : f32
    %40 = vector.broadcast %cst_8 : f32 to vector<2x1xf32>
    %41 = arith.mulf %39, %40 : vector<2x1xf32>
    %42 = arith.addf %38, %41 : vector<2x1xf32>
    %cst_9 = arith.constant 2.000000e+00 : f32
    %43 = vector.broadcast %cst_9 : f32 to vector<2x1xf32>
    %44 = arith.mulf %43, %28 : vector<2x1xf32>
    %cst_10 = arith.constant -1.77635684E-14 : f32
    %45 = vector.broadcast %cst_10 : f32 to vector<2x1xf32>
    %46 = arith.mulf %27, %45 : vector<2x1xf32>
    %cst_11 = arith.constant -2.84217094E-14 : f32
    %47 = vector.broadcast %cst_11 : f32 to vector<2x1xf32>
    %48 = arith.mulf %24, %47 : vector<2x1xf32>
    %49 = arith.addf %46, %48 : vector<2x1xf32>
    %50 = arith.mulf %44, %49 : vector<2x1xf32>
    %51 = arith.addf %42, %50 : vector<2x1xf32>
    %52 = vector.shape_cast %33 : vector<2x1xf32> to vector<1x2x1xf32>
    %cst_12 = arith.constant dense<0.000000e+00> : vector<1xf32>
    %53 = vector.multi_reduction <add>, %52, %cst_12 [1, 2] : vector<1x2x1xf32> to vector<1xf32>
    %54 = vector.shape_cast %53 : vector<1xf32> to vector<1x1x1xf32>
    %55 = vector.extract %54[0, 0, 0] : f32 from vector<1x1x1xf32>
    %cst_13 = arith.constant 1.250000e-03 : f32
    %56 = arith.mulf %55, %cst_13 : f32
    %c0_14 = arith.constant 0 : index
    %57 = memref.load %arg2[%c0_14] : memref<3xf32, #tpu.memory_space<smem>>
    memref.store %56, %arg2[%c0_14] : memref<3xf32, #tpu.memory_space<smem>>
    %58 = vector.shape_cast %38 : vector<2x1xf32> to vector<1x2x1xf32>
    %cst_15 = arith.constant dense<0.000000e+00> : vector<1xf32>
    %59 = vector.multi_reduction <add>, %58, %cst_15 [1, 2] : vector<1x2x1xf32> to vector<1xf32>
    %60 = vector.shape_cast %59 : vector<1xf32> to vector<1x1x1xf32>
    %61 = vector.extract %60[0, 0, 0] : f32 from vector<1x1x1xf32>
    %cst_16 = arith.constant 1.250000e-03 : f32
    %62 = arith.mulf %61, %cst_16 : f32
    %c1 = arith.constant 1 : index
    %63 = memref.load %arg2[%c1] : memref<3xf32, #tpu.memory_space<smem>>
    memref.store %62, %arg2[%c1] : memref<3xf32, #tpu.memory_space<smem>>
    %64 = vector.shape_cast %51 : vector<2x1xf32> to vector<1x2x1xf32>
    %cst_17 = arith.constant dense<0.000000e+00> : vector<1xf32>
    %65 = vector.multi_reduction <add>, %64, %cst_17 [1, 2] : vector<1x2x1xf32> to vector<1xf32>
    %66 = vector.shape_cast %65 : vector<1xf32> to vector<1x1x1xf32>
    %67 = vector.extract %66[0, 0, 0] : f32 from vector<1x1x1xf32>
    %cst_18 = arith.constant 1.250000e-03 : f32
    %68 = arith.mulf %67, %cst_18 : f32
    %c2 = arith.constant 2 : index
    %69 = memref.load %arg2[%c2] : memref<3xf32, #tpu.memory_space<smem>>
    memref.store %68, %arg2[%c2] : memref<3xf32, #tpu.memory_space<smem>>
    return
  }
}

</mosaic_0001>

<llo_original>
// kernel: sequential_grid_loss.1
$region0: #{sequential_grid_loss.1}
  #allocation0 [shape = 'u32[]', space=smem, size = 0x4, offset = 0x4, fixed_abs, tag = 'smem constant byte address 0x4 - core index']
  #allocation1 [shape = 'u32[72,128]{1,0:T(1,128)}', space=vmem, size = 0x9000, scoped, tag = 'internal scratch']
  %s0 = inlined_call_operand.hbm [shape: f32[2,3], index: 0, kind: input, shape index: {}]
  %s1 = inlined_call_operand.hbm [shape: f32[2,3], index: 1, kind: input, shape index: {}]
  %s2 = inlined_call_operand.vmem [shape: f32[3], index: 2, kind: output, shape index: {}]
  %s3 = sld [smem:[#allocation0]]
  $region26: #{sequential_grid_loss.1} parent=0
    _
  %s5 = ssub.s32 1, %s3
  %s6 = scalar_select 0, %s5, %s3
  $region1: #{sequential_grid_loss.1} parent=0
    #allocation2 [shape = 'u8[1024]{0}', space=vmem, size = 0x400, scoped, tag = 'input window, operand 0, single buffered']
    #allocation3 [shape = 's32[1]{0}', space=sflag, size = 0x4, scoped, tag = 'scoped memory for sequential_grid_loss.1']
    #allocation4 [shape = 's32[1]{0}', space=sflag, size = 0x4, scoped, tag = 'scoped memory for sequential_grid_loss.1']
    #allocation5 [shape = 'u8[1024]{0}', space=vmem, size = 0x400, scoped, tag = 'input window, operand 1, single buffered']
    #allocation6 [shape = 's32[1]{0}', space=sflag, size = 0x4, scoped, tag = 'scoped memory for sequential_grid_loss.1']
    #allocation7 [shape = 'u8[512]{0}', space=smem, size = 0x200, scoped, tag = 'output window, operand 0, single buffered']
    %7 = vsyncpa [#allocation3], 0
    %8 = vsyncpa [#allocation6], 0
    %9 = vsyncpa [#allocation4], 0
    // Predicated region
    $region2: #{sequential_grid_loss.1} parent=1 // pred_check
      _
    $region3: #{sequential_grid_loss.1} parent=1 // pred_check_branch
      %11 = sbr.rel (0) target = $region5
    $region4: #{sequential_grid_loss.1} parent=1 // pred_region
      %13 = vsyncadd [#allocation3], 0
      %s15 = sshll.u32 %s0, 4
      %s16 = int_to_ptr.hbm [resolvable:$true] %s15
      %s17 = sshll.u32 [#allocation2], 4
      %s18 = int_to_ptr.vmem [resolvable:$true] %s17
      %20 = dma.hbm_to_vmem [thread:$0]  %s16, 32, %s18, [#allocation3]
    $region5: #{sequential_grid_loss.1} parent=1 // pred_fallthru
      _
    // Predicated region
    $region6: #{sequential_grid_loss.1} parent=1 // pred_check
      _
    $region7: #{sequential_grid_loss.1} parent=1 // pred_check_branch
      %22 = sbr.rel (0) target = $region9
    $region8: #{sequential_grid_loss.1} parent=1 // pred_region
      %24 = vsyncadd [#allocation6], 0
      %s26 = sshll.u32 %s1, 4
      %s27 = int_to_ptr.hbm [resolvable:$true] %s26
      %s28 = sshll.u32 [#allocation5], 4
      %s29 = int_to_ptr.vmem [resolvable:$true] %s28
      %31 = dma.hbm_to_vmem [thread:$0]  %s27, 32, %s29, [#allocation6]
    $region9: #{sequential_grid_loss.1} parent=1 // pred_fallthru
      _
    // Predicated region
    $region10: #{sequential_grid_loss.1} parent=1 // pred_check
      _
    $region11: #{sequential_grid_loss.1} parent=1 // pred_check_branch
      %33 = sbr.rel (0) target = $region13
    $region12: #{sequential_grid_loss.1} parent=1 // pred_region
      %35 = dma.done [#allocation3], 32
    $region13: #{sequential_grid_loss.1} parent=1 // pred_fallthru
      _
    // Predicated region
    $region14: #{sequential_grid_loss.1} parent=1 // pred_check
      _
    $region15: #{sequential_grid_loss.1} parent=1 // pred_check_branch
      %37 = sbr.rel (0) target = $region17
    $region16: #{sequential_grid_loss.1} parent=1 // pred_region
      %39 = dma.done [#allocation6], 32
    $region17: #{sequential_grid_loss.1} parent=1 // pred_fallthru
      _
    %v40 = vld [vmem:[#allocation2] sm:$0x3]
    %v41 = vld [vmem:[#allocation5] sm:$0x3]
    %v42 = vrcp.pop 180.0
    %v43 = vmul.f32 180.0, %v42
    %v44 = vsub.f32 1.0, %v43
    %v45 = vmul.f32 %v42, %v44
    %v46 = vadd.f32 %v42, %v45
    %vm47 = vweird.f32 %v42
    %v48 = vsel %vm47, %v42, %v46
    %v49 = vmul.f32 %v40, %v48
    %v50 = vmul.f32 %v49, 3.1415927
    %v51 = vmul.f32 %v41, %v48
    %v52 = vmul.f32 %v51, 3.1415927
    %v53 = vand.u32 2147483647, %v50
    %vm54 = vcmp.le.f32.partialorder %v53, 0.7853982
    %vm55 = vcmp.lt.s32.totalorder %v50, 0
    %v56 = vand.u32 %v50, 2139095040
    %v57 = vshrl.u32 %v56, 23
    %v58 = vsub.s32 %v57, 127
    %v59 = vand.u32 2147483647, %v50
    %v60 = vand.u32 %v59, 8388607
    %v61 = vor.u32 %v60, 8388608
    %v62 = vsub.s32 0, %v61
    %v63 = vadd.s32 %v58, 1
    %vm64 = vcmp.gt.s32.totalorder %v63, 0
    %v65 = vsel %vm64, %v63, 0
    %v66 = vshrl.u32 %v65, 5
    %v67 = vand.u32 %v65, 31
    %v68 = vsub.s32 32, %v67
    %v69 = vshrl.u32 683565275, %v68
    %v70 = vshll.u32 683565275, %v67
    %v71 = vshrl.u32 2475754826, %v68
    %v72 = vor.u32 %v70, %v71
    %v73 = vshll.u32 2475754826, %v67
    %v74 = vshrl.u32 2131351028, %v68
    %v75 = vor.u32 %v73, %v74
    %v76 = vshll.u32 2131351028, %v67
    %v77 = vshrl.u32 2102212464, %v68
    %v78 = vor.u32 %v76, %v77
    %v79 = vshll.u32 2102212464, %v67
    %v80 = vshrl.u32 920167782, %v68
    %v81 = vor.u32 %v79, %v80
    %v82 = vshll.u32 920167782, %v67
    %v83 = vshrl.u32 1326507024, %v68
    %v84 = vor.u32 %v82, %v83
    %vm85 = vcmp.lt.s32.totalorder %v66, 1
    %vm86 = vcmp.lt.s32.totalorder %v66, 2
    %vm87 = vcmp.lt.s32.totalorder %v66, 3
    %vm88 = vcmp.lt.s32.totalorder %v66, 4
    %v89 = vsel %vm85, %v69, %v72
    %v90 = vsel %vm88, %v78, 2102212464
    %v91 = vsel %vm87, %v75, %v90
    %v92 = vsel %vm86, %v89, %v91
    %v93 = vsel %vm85, %v72, %v75
    %v94 = vsel %vm88, %v81, 920167782
    %v95 = vsel %vm87, %v78, %v94
    %v96 = vsel %vm86, %v93, %v95
    %v97 = vsel %vm85, %v75, %v78
    %v98 = vsel %vm88, %v84, 1326507024
    %v99 = vsel %vm87, %v81, %v98
    %v100 = vsel %vm86, %v97, %v99
    %v101 = vshll.u32 %v61, 8
    %v102 = vand.u32 %v101, 65535
    %v103 = vshrl.u32 %v101, 16
    %v104 = vand.u32 %v100, 65535
    %v105 = vshrl.u32 %v100, 16
    %v106 = vmul.u32 %v102, %v104
    %v107 = vmul.u32 %v102, %v105
    %v108 = vmul.u32 %v103, %v104
    %v109 = vmul.u32 %v103, %v105
    %v110 = vshll.u32 %v107, 16
    %v111 = vshrl.u32 %v107, 16
    %v112 = vshll.u32 %v108, 16
    %v113 = vshrl.u32 %v108, 16
    %vm114 = vc.u32 %v106, %v110
    %v115 = vsel %vm114, 1, 0
    %v116 = vadd.s32 %v106, %v110
    %v117 = vadd.s32 %v109, %v115
    %vm118 = vc.u32 %v116, %v112
    %v119 = vsel %vm118, 1, 0
    %v120 = vadd.s32 %v116, %v112
    %v121 = vadd.s32 %v117, %v119
    %v122 = vadd.s32 %v121, %v111
    %v123 = vadd.s32 %v122, %v113
    %v124 = vand.u32 %v101, 65535
    %v125 = vshrl.u32 %v101, 16
    %v126 = vand.u32 %v96, 65535
    %v127 = vshrl.u32 %v96, 16
    %v128 = vmul.u32 %v124, %v126
    %v129 = vmul.u32 %v124, %v127
    %v130 = vmul.u32 %v125, %v126
    %v131 = vmul.u32 %v125, %v127
    %v132 = vshll.u32 %v129, 16
    %v133 = vshrl.u32 %v129, 16
    %v134 = vshll.u32 %v130, 16
    %v135 = vshrl.u32 %v130, 16
    %vm136 = vc.u32 %v128, %v132
    %v137 = vsel %vm136, 1, 0
    %v138 = vadd.s32 %v128, %v132
    %v139 = vadd.s32 %v131, %v137
    %vm140 = vc.u32 %v138, %v134
    %v141 = vsel %vm140, 1, 0
    %v142 = vadd.s32 %v138, %v134
    %v143 = vadd.s32 %v139, %v141
    %v144 = vadd.s32 %v143, %v133
    %v145 = vadd.s32 %v144, %v135
    %v146 = vmul.u32 %v101, %v92
    %v147 = vadd.s32 %v123, %v142
    %vm148 = vc.u32 %v123, %v142
    %v149 = vadd.s32 %v145, 1
    %v150 = vsel %vm148, %v149, %v145
    %v151 = vadd.s32 %v146, %v150
    %v152 = vadd.s32 %v151, 536870912
    %v153 = vshrl.u32 %v152, 30
    %v154 = vshll.u32 %v153, 30
    %v155 = vsub.s32 %v151, %v154
    %vm156 = vcmp.lt.s32.totalorder %v155, 0
    %v157 = vsub.s32 0, %v155
    %v158 = vsel %vm156, %v157, %v155
    %v159 = vclz %v158
    %v160 = vsub.s32 %v159, 2
    %vm161 = vcmp.gt.s32.totalorder 0, %v160
    %v162 = vsel %vm161, 0, %v160
    %v163 = vsub.s32 32, %v162
    %v164 = vshll.u32 %v155, %v162
    %v165 = vshrl.u32 %v147, %v163
    %v166 = vor.u32 %v164, %v165
    %v167 = vsub.s32 4294967266, %v162
    %v168 = vadd.s32 %v167, 127
    %v169 = vshll.u32 %v168, 23
    %v170 = vor.u32 4788187, %v169
    %v171 = vand.u32 2147483647, %v170
    %v173 = vcvt.s32.f32 %v166
    %v174 = vmul.f32 %v173, %v171
    %v175 = vxor.u32 %v174, 2147483648
    %v176 = vsel %vm55, %v175, %v174
    %v177 = vsub.s32 4, %v153
    %v178 = vsel %vm55, %v177, %v153
    %v179 = vsel %vm54, %v50, %v176
    %v180 = vsel %vm54, 0, %v178
    %v181 = vmul.f32 %v179, %v179
    %v182 = vmul.f32 %v181, -0.001358992
    %v183 = vadd.f32 %v182, 0.041655596
    %v184 = vmul.f32 %v181, %v183
    %v185 = vadd.f32 %v184, -0.4999988
    %v186 = vmul.f32 %v181, %v185
    %v187 = vadd.f32 1.0, %v186
    %v188 = vmul.f32 %v179, %v179
    %v189 = vmul.f32 %v188, -0.00019511016
    %v190 = vadd.f32 %v189, 0.008332121
    %v191 = vmul.f32 %v188, %v190
    %v192 = vadd.f32 %v191, -0.16666654
    %v193 = vmul.f32 %v188, %v192
    %v194 = vadd.f32 %v193, 1.0
    %v195 = vmul.f32 %v194, %v179
    %vm196 = vweird.f32 %v50
    %v197 = vand.u32 %v180, 3
    %vm198 = vcmp.lt.s32.totalorder %v197, 2
    %vm199 = vcmp.eq.s32.totalorder %v197, 0
    %v200 = vxor.u32 %v195, 2147483648
    %v201 = vsel %vm199, %v187, %v200
    %vm202 = vcmp.eq.s32.totalorder %v197, 2
    %v203 = vxor.u32 %v187, 2147483648
    %v204 = vsel %vm202, %v203, %v195
    %v205 = vsel %vm198, %v201, %v204
    %v206 = vsel %vm196, nan, %v205
    %v207 = vand.u32 2147483647, %v50
    %vm208 = vcmp.le.f32.partialorder %v207, 0.7853982
    %vm209 = vcmp.lt.s32.totalorder %v50, 0
    %v210 = vand.u32 %v50, 2139095040
    %v211 = vshrl.u32 %v210, 23
    %v212 = vsub.s32 %v211, 127
    %v213 = vand.u32 2147483647, %v50
    %v214 = vand.u32 %v213, 8388607
    %v215 = vor.u32 %v214, 8388608
    %v216 = vsub.s32 0, %v215
    %v217 = vadd.s32 %v212, 1
    %vm218 = vcmp.gt.s32.totalorder %v217, 0
    %v219 = vsel %vm218, %v217, 0
    %v220 = vshrl.u32 %v219, 5
    %v221 = vand.u32 %v219, 31
    %v222 = vsub.s32 32, %v221
    %v223 = vshrl.u32 683565275, %v222
    %v224 = vshll.u32 683565275, %v221
    %v225 = vshrl.u32 2475754826, %v222
    %v226 = vor.u32 %v224, %v225
    %v227 = vshll.u32 2475754826, %v221
    %v228 = vshrl.u32 2131351028, %v222
    %v229 = vor.u32 %v227, %v228
    %v230 = vshll.u32 2131351028, %v221
    %v231 = vshrl.u32 2102212464, %v222
    %v232 = vor.u32 %v230, %v231
    %v233 = vshll.u32 2102212464, %v221
    %v234 = vshrl.u32 920167782, %v222
    %v235 = vor.u32 %v233, %v234
    %v236 = vshll.u32 920167782, %v221
    %v237 = vshrl.u32 1326507024, %v222
    %v238 = vor.u32 %v236, %v237
    %vm239 = vcmp.lt.s32.totalorder %v220, 1
    %vm240 = vcmp.lt.s32.totalorder %v220, 2
    %vm241 = vcmp.lt.s32.totalorder %v220, 3
    %vm242 = vcmp.lt.s32.totalorder %v220, 4
    %v243 = vsel %vm239, %v223, %v226
    %v244 = vsel %vm242, %v232, 2102212464
    %v245 = vsel %vm241, %v229, %v244
    %v246 = vsel %vm240, %v243, %v245
    %v247 = vsel %vm239, %v226, %v229
    %v248 = vsel %vm242, %v235, 920167782
    %v249 = vsel %vm241, %v232, %v248
    %v250 = vsel %vm240, %v247, %v249
    %v251 = vsel %vm239, %v229, %v232
    %v252 = vsel %vm242, %v238, 1326507024
    %v253 = vsel %vm241, %v235, %v252
    %v254 = vsel %vm240, %v251, %v253
    %v255 = vshll.u32 %v215, 8
    %v256 = vand.u32 %v255, 65535
    %v257 = vshrl.u32 %v255, 16
    %v258 = vand.u32 %v254, 65535
    %v259 = vshrl.u32 %v254, 16
    %v260 = vmul.u32 %v256, %v258
    %v261 = vmul.u32 %v256, %v259
    %v262 = vmul.u32 %v257, %v258
    %v263 = vmul.u32 %v257, %v259
    %v264 = vshll.u32 %v261, 16
    %v265 = vshrl.u32 %v261, 16
    %v266 = vshll.u32 %v262, 16
    %v267 = vshrl.u32 %v262, 16
    %vm268 = vc.u32 %v260, %v264
    %v269 = vsel %vm268, 1, 0
    %v270 = vadd.s32 %v260, %v264
    %v271 = vadd.s32 %v263, %v269
    %vm272 = vc.u32 %v270, %v266
    %v273 = vsel %vm272, 1, 0
    %v274 = vadd.s32 %v270, %v266
    %v275 = vadd.s32 %v271, %v273
    %v276 = vadd.s32 %v275, %v265
    %v277 = vadd.s32 %v276, %v267
    %v278 = vand.u32 %v255, 65535
    %v279 = vshrl.u32 %v255, 16
    %v280 = vand.u32 %v250, 65535
    %v281 = vshrl.u32 %v250, 16
    %v282 = vmul.u32 %v278, %v280
    %v283 = vmul.u32 %v278, %v281
    %v284 = vmul.u32 %v279, %v280
    %v285 = vmul.u32 %v279, %v281
    %v286 = vshll.u32 %v283, 16
    %v287 = vshrl.u32 %v283, 16
    %v288 = vshll.u32 %v284, 16
    %v289 = vshrl.u32 %v284, 16
    %vm290 = vc.u32 %v282, %v286
    %v291 = vsel %vm290, 1, 0
    %v292 = vadd.s32 %v282, %v286
    %v293 = vadd.s32 %v285, %v291
    %vm294 = vc.u32 %v292, %v288
    %v295 = vsel %vm294, 1, 0
    %v296 = vadd.s32 %v292, %v288
    %v297 = vadd.s32 %v293, %v295
    %v298 = vadd.s32 %v297, %v287
    %v299 = vadd.s32 %v298, %v289
    %v300 = vmul.u32 %v255, %v246
    %v301 = vadd.s32 %v277, %v296
    %vm302 = vc.u32 %v277, %v296
    %v303 = vadd.s32 %v299, 1
    %v304 = vsel %vm302, %v303, %v299
    %v305 = vadd.s32 %v300, %v304
    %v306 = vadd.s32 %v305, 536870912
    %v307 = vshrl.u32 %v306, 30
    %v308 = vshll.u32 %v307, 30
    %v309 = vsub.s32 %v305, %v308
    %vm310 = vcmp.lt.s32.totalorder %v309, 0
    %v311 = vsub.s32 0, %v309
    %v312 = vsel %vm310, %v311, %v309
    %v313 = vclz %v312
    %v314 = vsub.s32 %v313, 2
    %vm315 = vcmp.gt.s32.totalorder 0, %v314
    %v316 = vsel %vm315, 0, %v314
    %v317 = vsub.s32 32, %v316
    %v318 = vshll.u32 %v309, %v316
    %v319 = vshrl.u32 %v301, %v317
    %v320 = vor.u32 %v318, %v319
    %v321 = vsub.s32 4294967266, %v316
    %v322 = vadd.s32 %v321, 127
    %v323 = vshll.u32 %v322, 23
    %v324 = vor.u32 4788187, %v323
    %v325 = vand.u32 2147483647, %v324
    %v327 = vcvt.s32.f32 %v320
    %v328 = vmul.f32 %v327, %v325
    %v329 = vxor.u32 %v328, 2147483648
    %v330 = vsel %vm209, %v329, %v328
    %v331 = vsub.s32 4, %v307
    %v332 = vsel %vm209, %v331, %v307
    %v333 = vsel %vm208, %v50, %v330
    %v334 = vsel %vm208, 0, %v332
    %v335 = vmul.f32 %v333, %v333
    %v336 = vmul.f32 %v335, -0.001358992
    %v337 = vadd.f32 %v336, 0.041655596
    %v338 = vmul.f32 %v335, %v337
    %v339 = vadd.f32 %v338, -0.4999988
    %v340 = vmul.f32 %v335, %v339
    %v341 = vadd.f32 1.0, %v340
    %v342 = vmul.f32 %v333, %v333
    %v343 = vmul.f32 %v342, -0.00019511016
    %v344 = vadd.f32 %v343, 0.008332121
    %v345 = vmul.f32 %v342, %v344
    %v346 = vadd.f32 %v345, -0.16666654
    %v347 = vmul.f32 %v342, %v346
    %v348 = vadd.f32 %v347, 1.0
    %v349 = vmul.f32 %v348, %v333
    %vm350 = vweird.f32 %v50
    %v351 = vadd.s32 %v334, 3
    %v352 = vand.u32 %v351, 3
    %vm353 = vcmp.lt.s32.totalorder %v352, 2
    %vm354 = vcmp.eq.s32.totalorder %v352, 0
    %v355 = vxor.u32 %v349, 2147483648
    %v356 = vsel %vm354, %v341, %v355
    %vm357 = vcmp.eq.s32.totalorder %v352, 2
    %v358 = vxor.u32 %v341, 2147483648
    %v359 = vsel %vm357, %v358, %v349
    %v360 = vsel %vm353, %v356, %v359
    %v361 = vsel %vm350, nan, %v360
    %v362 = vand.u32 2147483647, %v52
    %vm363 = vcmp.le.f32.partialorder %v362, 0.7853982
    %vm364 = vcmp.lt.s32.totalorder %v52, 0
    %v365 = vand.u32 %v52, 2139095040
    %v366 = vshrl.u32 %v365, 23
    %v367 = vsub.s32 %v366, 127
    %v368 = vand.u32 2147483647, %v52
    %v369 = vand.u32 %v368, 8388607
    %v370 = vor.u32 %v369, 8388608
    %v371 = vsub.s32 0, %v370
    %v372 = vadd.s32 %v367, 1
    %vm373 = vcmp.gt.s32.totalorder %v372, 0
    %v374 = vsel %vm373, %v372, 0
    %v375 = vshrl.u32 %v374, 5
    %v376 = vand.u32 %v374, 31
    %v377 = vsub.s32 32, %v376
    %v378 = vshrl.u32 683565275, %v377
    %v379 = vshll.u32 683565275, %v376
    %v380 = vshrl.u32 2475754826, %v377
    %v381 = vor.u32 %v379, %v380
    %v382 = vshll.u32 2475754826, %v376
    %v383 = vshrl.u32 2131351028, %v377
    %v384 = vor.u32 %v382, %v383
    %v385 = vshll.u32 2131351028, %v376
    %v386 = vshrl.u32 2102212464, %v377
    %v387 = vor.u32 %v385, %v386
    %v388 = vshll.u32 2102212464, %v376
    %v389 = vshrl.u32 920167782, %v377
    %v390 = vor.u32 %v388, %v389
    %v391 = vshll.u32 920167782, %v376
    %v392 = vshrl.u32 1326507024, %v377
    %v393 = vor.u32 %v391, %v392
    %vm394 = vcmp.lt.s32.totalorder %v375, 1
    %vm395 = vcmp.lt.s32.totalorder %v375, 2
    %vm396 = vcmp.lt.s32.totalorder %v375, 3
    %vm397 = vcmp.lt.s32.totalorder %v375, 4
    %v398 = vsel %vm394, %v378, %v381
    %v399 = vsel %vm397, %v387, 2102212464
    %v400 = vsel %vm396, %v384, %v399
    %v401 = vsel %vm395, %v398, %v400
    %v402 = vsel %vm394, %v381, %v384
    %v403 = vsel %vm397, %v390, 920167782
    %v404 = vsel %vm396, %v387, %v403
    %v405 = vsel %vm395, %v402, %v404
    %v406 = vsel %vm394, %v384, %v387
    %v407 = vsel %vm397, %v393, 1326507024
    %v408 = vsel %vm396, %v390, %v407
    %v409 = vsel %vm395, %v406, %v408
    %v410 = vshll.u32 %v370, 8
    %v411 = vand.u32 %v410, 65535
    %v412 = vshrl.u32 %v410, 16
    %v413 = vand.u32 %v409, 65535
    %v414 = vshrl.u32 %v409, 16
    %v415 = vmul.u32 %v411, %v413
    %v416 = vmul.u32 %v411, %v414
    %v417 = vmul.u32 %v412, %v413
    %v418 = vmul.u32 %v412, %v414
    %v419 = vshll.u32 %v416, 16
    %v420 = vshrl.u32 %v416, 16
    %v421 = vshll.u32 %v417, 16
    %v422 = vshrl.u32 %v417, 16
    %vm423 = vc.u32 %v415, %v419
    %v424 = vsel %vm423, 1, 0
    %v425 = vadd.s32 %v415, %v419
    %v426 = vadd.s32 %v418, %v424
    %vm427 = vc.u32 %v425, %v421
    %v428 = vsel %vm427, 1, 0
    %v429 = vadd.s32 %v425, %v421
    %v430 = vadd.s32 %v426, %v428
    %v431 = vadd.s32 %v430, %v420
    %v432 = vadd.s32 %v431, %v422
    %v433 = vand.u32 %v410, 65535
    %v434 = vshrl.u32 %v410, 16
    %v435 = vand.u32 %v405, 65535
    %v436 = vshrl.u32 %v405, 16
    %v437 = vmul.u32 %v433, %v435
    %v438 = vmul.u32 %v433, %v436
    %v439 = vmul.u32 %v434, %v435
    %v440 = vmul.u32 %v434, %v436
    %v441 = vshll.u32 %v438, 16
    %v442 = vshrl.u32 %v438, 16
    %v443 = vshll.u32 %v439, 16
    %v444 = vshrl.u32 %v439, 16
    %vm445 = vc.u32 %v437, %v441
    %v446 = vsel %vm445, 1, 0
    %v447 = vadd.s32 %v437, %v441
    %v448 = vadd.s32 %v440, %v446
    %vm449 = vc.u32 %v447, %v443
    %v450 = vsel %vm449, 1, 0
    %v451 = vadd.s32 %v447, %v443
    %v452 = vadd.s32 %v448, %v450
    %v453 = vadd.s32 %v452, %v442
    %v454 = vadd.s32 %v453, %v444
    %v455 = vmul.u32 %v410, %v401
    %v456 = vadd.s32 %v432, %v451
    %vm457 = vc.u32 %v432, %v451
    %v458 = vadd.s32 %v454, 1
    %v459 = vsel %vm457, %v458, %v454
    %v460 = vadd.s32 %v455, %v459
    %v461 = vadd.s32 %v460, 536870912
    %v462 = vshrl.u32 %v461, 30
    %v463 = vshll.u32 %v462, 30
    %v464 = vsub.s32 %v460, %v463
    %vm465 = vcmp.lt.s32.totalorder %v464, 0
    %v466 = vsub.s32 0, %v464
    %v467 = vsel %vm465, %v466, %v464
    %v468 = vclz %v467
    %v469 = vsub.s32 %v468, 2
    %vm470 = vcmp.gt.s32.totalorder 0, %v469
    %v471 = vsel %vm470, 0, %v469
    %v472 = vsub.s32 32, %v471
    %v473 = vshll.u32 %v464, %v471
    %v474 = vshrl.u32 %v456, %v472
    %v475 = vor.u32 %v473, %v474
    %v476 = vsub.s32 4294967266, %v471
    %v477 = vadd.s32 %v476, 127
    %v478 = vshll.u32 %v477, 23
    %v479 = vor.u32 4788187, %v478
    %v480 = vand.u32 2147483647, %v479
    %v482 = vcvt.s32.f32 %v475
    %v483 = vmul.f32 %v482, %v480
    %v484 = vxor.u32 %v483, 2147483648
    %v485 = vsel %vm364, %v484, %v483
    %v486 = vsub.s32 4, %v462
    %v487 = vsel %vm364, %v486, %v462
    %v488 = vsel %vm363, %v52, %v485
    %v489 = vsel %vm363, 0, %v487
    %v490 = vmul.f32 %v488, %v488
    %v491 = vmul.f32 %v490, -0.001358992
    %v492 = vadd.f32 %v491, 0.041655596
    %v493 = vmul.f32 %v490, %v492
    %v494 = vadd.f32 %v493, -0.4999988
    %v495 = vmul.f32 %v490, %v494
    %v496 = vadd.f32 1.0, %v495
    %v497 = vmul.f32 %v488, %v488
    %v498 = vmul.f32 %v497, -0.00019511016
    %v499 = vadd.f32 %v498, 0.008332121
    %v500 = vmul.f32 %v497, %v499
    %v501 = vadd.f32 %v500, -0.16666654
    %v502 = vmul.f32 %v497, %v501
    %v503 = vadd.f32 %v502, 1.0
    %v504 = vmul.f32 %v503, %v488
    %vm505 = vweird.f32 %v52
    %v506 = vand.u32 %v489, 3
    %vm507 = vcmp.lt.s32.totalorder %v506, 2
    %vm508 = vcmp.eq.s32.totalorder %v506, 0
    %v509 = vxor.u32 %v504, 2147483648
    %v510 = vsel %vm508, %v496, %v509
    %vm511 = vcmp.eq.s32.totalorder %v506, 2
    %v512 = vxor.u32 %v496, 2147483648
    %v513 = vsel %vm511, %v512, %v504
    %v514 = vsel %vm507, %v510, %v513
    %v515 = vsel %vm505, nan, %v514
    %v516 = vand.u32 2147483647, %v52
    %vm517 = vcmp.le.f32.partialorder %v516, 0.7853982
    %vm518 = vcmp.lt.s32.totalorder %v52, 0
    %v519 = vand.u32 %v52, 2139095040
    %v520 = vshrl.u32 %v519, 23
    %v521 = vsub.s32 %v520, 127
    %v522 = vand.u32 2147483647, %v52
    %v523 = vand.u32 %v522, 8388607
    %v524 = vor.u32 %v523, 8388608
    %v525 = vsub.s32 0, %v524
    %v526 = vadd.s32 %v521, 1
    %vm527 = vcmp.gt.s32.totalorder %v526, 0
    %v528 = vsel %vm527, %v526, 0
    %v529 = vshrl.u32 %v528, 5
    %v530 = vand.u32 %v528, 31
    %v531 = vsub.s32 32, %v530
    %v532 = vshrl.u32 683565275, %v531
    %v533 = vshll.u32 683565275, %v530
    %v534 = vshrl.u32 2475754826, %v531
    %v535 = vor.u32 %v533, %v534
    %v536 = vshll.u32 2475754826, %v530
    %v537 = vshrl.u32 2131351028, %v531
    %v538 = vor.u32 %v536, %v537
    %v539 = vshll.u32 2131351028, %v530
    %v540 = vshrl.u32 2102212464, %v531
    %v541 = vor.u32 %v539, %v540
    %v542 = vshll.u32 2102212464, %v530
    %v543 = vshrl.u32 920167782, %v531
    %v544 = vor.u32 %v542, %v543
    %v545 = vshll.u32 920167782, %v530
    %v546 = vshrl.u32 1326507024, %v531
    %v547 = vor.u32 %v545, %v546
    %vm548 = vcmp.lt.s32.totalorder %v529, 1
    %vm549 = vcmp.lt.s32.totalorder %v529, 2
    %vm550 = vcmp.lt.s32.totalorder %v529, 3
    %vm551 = vcmp.lt.s32.totalorder %v529, 4
    %v552 = vsel %vm548, %v532, %v535
    %v553 = vsel %vm551, %v541, 2102212464
    %v554 = vsel %vm550, %v538, %v553
    %v555 = vsel %vm549, %v552, %v554
    %v556 = vsel %vm548, %v535, %v538
    %v557 = vsel %vm551, %v544, 920167782
    %v558 = vsel %vm550, %v541, %v557
    %v559 = vsel %vm549, %v556, %v558
    %v560 = vsel %vm548, %v538, %v541
    %v561 = vsel %vm551, %v547, 1326507024
    %v562 = vsel %vm550, %v544, %v561
    %v563 = vsel %vm549, %v560, %v562
    %v564 = vshll.u32 %v524, 8
    %v565 = vand.u32 %v564, 65535
    %v566 = vshrl.u32 %v564, 16
    %v567 = vand.u32 %v563, 65535
    %v568 = vshrl.u32 %v563, 16
    %v569 = vmul.u32 %v565, %v567
    %v570 = vmul.u32 %v565, %v568
    %v571 = vmul.u32 %v566, %v567
    %v572 = vmul.u32 %v566, %v568
    %v573 = vshll.u32 %v570, 16
    %v574 = vshrl.u32 %v570, 16
    %v575 = vshll.u32 %v571, 16
    %v576 = vshrl.u32 %v571, 16
    %vm577 = vc.u32 %v569, %v573
    %v578 = vsel %vm577, 1, 0
    %v579 = vadd.s32 %v569, %v573
    %v580 = vadd.s32 %v572, %v578
    %vm581 = vc.u32 %v579, %v575
    %v582 = vsel %vm581, 1, 0
    %v583 = vadd.s32 %v579, %v575
    %v584 = vadd.s32 %v580, %v582
    %v585 = vadd.s32 %v584, %v574
    %v586 = vadd.s32 %v585, %v576
    %v587 = vand.u32 %v564, 65535
    %v588 = vshrl.u32 %v564, 16
    %v589 = vand.u32 %v559, 65535
    %v590 = vshrl.u32 %v559, 16
    %v591 = vmul.u32 %v587, %v589
    %v592 = vmul.u32 %v587, %v590
    %v593 = vmul.u32 %v588, %v589
    %v594 = vmul.u32 %v588, %v590
    %v595 = vshll.u32 %v592, 16
    %v596 = vshrl.u32 %v592, 16
    %v597 = vshll.u32 %v593, 16
    %v598 = vshrl.u32 %v593, 16
    %vm599 = vc.u32 %v591, %v595
    %v600 = vsel %vm599, 1, 0
    %v601 = vadd.s32 %v591, %v595
    %v602 = vadd.s32 %v594, %v600
    %vm603 = vc.u32 %v601, %v597
    %v604 = vsel %vm603, 1, 0
    %v605 = vadd.s32 %v601, %v597
    %v606 = vadd.s32 %v602, %v604
    %v607 = vadd.s32 %v606, %v596
    %v608 = vadd.s32 %v607, %v598
    %v609 = vmul.u32 %v564, %v555
    %v610 = vadd.s32 %v586, %v605
    %vm611 = vc.u32 %v586, %v605
    %v612 = vadd.s32 %v608, 1
    %v613 = vsel %vm611, %v612, %v608
    %v614 = vadd.s32 %v609, %v613
    %v615 = vadd.s32 %v614, 536870912
    %v616 = vshrl.u32 %v615, 30
    %v617 = vshll.u32 %v616, 30
    %v618 = vsub.s32 %v614, %v617
    %vm619 = vcmp.lt.s32.totalorder %v618, 0
    %v620 = vsub.s32 0, %v618
    %v621 = vsel %vm619, %v620, %v618
    %v622 = vclz %v621
    %v623 = vsub.s32 %v622, 2
    %vm624 = vcmp.gt.s32.totalorder 0, %v623
    %v625 = vsel %vm624, 0, %v623
    %v626 = vsub.s32 32, %v625
    %v627 = vshll.u32 %v618, %v625
    %v628 = vshrl.u32 %v610, %v626
    %v629 = vor.u32 %v627, %v628
    %v630 = vsub.s32 4294967266, %v625
    %v631 = vadd.s32 %v630, 127
    %v632 = vshll.u32 %v631, 23
    %v633 = vor.u32 4788187, %v632
    %v634 = vand.u32 2147483647, %v633
    %v636 = vcvt.s32.f32 %v629
    %v637 = vmul.f32 %v636, %v634
    %v638 = vxor.u32 %v637, 2147483648
    %v639 = vsel %vm518, %v638, %v637
    %v640 = vsub.s32 4, %v616
    %v641 = vsel %vm518, %v640, %v616
    %v642 = vsel %vm517, %v52, %v639
    %v643 = vsel %vm517, 0, %v641
    %v644 = vmul.f32 %v642, %v642
    %v645 = vmul.f32 %v644, -0.001358992
    %v646 = vadd.f32 %v645, 0.041655596
    %v647 = vmul.f32 %v644, %v646
    %v648 = vadd.f32 %v647, -0.4999988
    %v649 = vmul.f32 %v644, %v648
    %v650 = vadd.f32 1.0, %v649
    %v651 = vmul.f32 %v642, %v642
    %v652 = vmul.f32 %v651, -0.00019511016
    %v653 = vadd.f32 %v652, 0.008332121
    %v654 = vmul.f32 %v651, %v653
    %v655 = vadd.f32 %v654, -0.16666654
    %v656 = vmul.f32 %v651, %v655
    %v657 = vadd.f32 %v656, 1.0
    %v658 = vmul.f32 %v657, %v642
    %vm659 = vweird.f32 %v52
    %v660 = vadd.s32 %v643, 3
    %v661 = vand.u32 %v660, 3
    %vm662 = vcmp.lt.s32.totalorder %v661, 2
    %vm663 = vcmp.eq.s32.totalorder %v661, 0
    %v664 = vxor.u32 %v658, 2147483648
    %v665 = vsel %vm663, %v650, %v664
    %vm666 = vcmp.eq.s32.totalorder %v661, 2
    %v667 = vxor.u32 %v650, 2147483648
    %v668 = vsel %vm666, %v667, %v658
    %v669 = vsel %vm662, %v665, %v668
    %v670 = vsel %vm659, nan, %v669
    %v671 = vsub.f32 %v206, %v515
    %v672 = vsub.f32 %v361, %v670
    %674 = vrot.lane.b32.xlu0 %v206, 1
    %v675 = vpop.permute.xlu0 %674
    %v677 = vmul.f32 %v40, %v675
    %679 = vrot.lane.b32.xlu0 %v515, 1
    %v680 = vpop.permute.xlu0 %679
    %v682 = vmul.f32 %v41, %v680
    %v683 = vsub.f32 %v677, %v682
    %685 = vrot.lane.b32.xlu0 %v361, 1
    %v686 = vpop.permute.xlu0 %685
    %v688 = vmul.f32 %v40, %v686
    %690 = vrot.lane.b32.xlu0 %v670, 1
    %v691 = vpop.permute.xlu0 %690
    %v693 = vmul.f32 %v41, %v691
    %v694 = vsub.f32 %v688, %v693
    %v695 = vsub.f32 %v40, %v41
    %v696 = vmul.f32 %v671, %v671
    %v697 = vmul.f32 %v672, %v672
    %v698 = vadd.f32 %v696, %v697
    %v699 = vmul.f32 %v698, 294.73685
    %v700 = vmul.f32 %v683, %v683
    %v701 = vmul.f32 %v694, %v694
    %v702 = vadd.f32 %v700, %v701
    %v703 = vmul.f32 %v702, 294.73685
    %v704 = vmul.f32 %v695, %v695
    %v705 = vmul.f32 %v704, 400.0
    %707 = vrot.lane.b32.xlu0 %v705, 127
    %v708 = vpop.permute.xlu0 %707
    %v710 = vadd.f32 %v703, %v708
    %v711 = vmul.f32 %v695, 2.0
    %v712 = vmul.f32 %v694, -1.7763568e-14
    %v713 = vmul.f32 %v683, -2.842171e-14
    %v714 = vadd.f32 %v712, %v713
    %716 = vrot.lane.b32.xlu0 %v714, 1
    %v717 = vpop.permute.xlu0 %716
    %v719 = vmul.f32 %v711, %v717
    %721 = vrot.lane.b32.xlu0 %v719, 127
    %v722 = vpop.permute.xlu0 %721
    %v724 = vadd.f32 %v710, %v722
    %vm725 = vcmask 1024
    %v726 = vsel %vm725, %v699, 0.0
    %727 = vadd.xlane.f32.xlu0 %v726
    %v728 = vpop.xlane.xlu0 %727
    %v729 = vrot.slane %v728, 4
    %v730 = vadd.f32 %v728, %v729
    %v731 = vrot.slane %v730, 2
    %v732 = vadd.f32 %v730, %v731
    %v733 = vrot.slane %v732, 1
    %v734 = vadd.f32 %v732, %v733
    %s735 = vtos %v734
    %s736 = smul.f32 %s735, 0.00125
    %s737 = scalar_lea.smem [#allocation7], 0
    %738 = sst [smem:[%s737]] %s736
    %740 = vrot.lane.b32.xlu0 %v703, 127
    %v741 = vpop.permute.xlu0 %740
    %v743 = vsel %vm725, %v741, 0.0
    %744 = vadd.xlane.f32.xlu0 %v743
    %v745 = vpop.xlane.xlu0 %744
    %v746 = vrot.slane %v745, 4
    %v747 = vadd.f32 %v745, %v746
    %v748 = vrot.slane %v747, 2
    %v749 = vadd.f32 %v747, %v748
    %v750 = vrot.slane %v749, 1
    %v751 = vadd.f32 %v749, %v750
    %s752 = vtos %v751
    %s753 = smul.f32 %s752, 0.00125
    %s754 = scalar_lea.smem [#allocation7], 1
    %755 = sst [smem:[%s754]] %s753
    %757 = vrot.lane.b32.xlu0 %v724, 127
    %v758 = vpop.permute.xlu0 %757
    %v760 = vsel %vm725, %v758, 0.0
    %761 = vadd.xlane.f32.xlu0 %v760
    %v762 = vpop.xlane.xlu0 %761
    %v763 = vrot.slane %v762, 4
    %v764 = vadd.f32 %v762, %v763
    %v765 = vrot.slane %v764, 2
    %v766 = vadd.f32 %v764, %v765
    %v767 = vrot.slane %v766, 1
    %v768 = vadd.f32 %v766, %v767
    %s769 = vtos %v768
    %s770 = smul.f32 %s769, 0.00125
    %s771 = scalar_lea.smem [#allocation7], 2
    %772 = sst [smem:[%s771]] %s770
    // Predicated region
    $region18: #{sequential_grid_loss.1} parent=1 // pred_check
      _
    $region19: #{sequential_grid_loss.1} parent=1 // pred_check_branch
      %774 = sbr.rel (0) target = $region21
    $region20: #{sequential_grid_loss.1} parent=1 // pred_region
      %776 = vsyncadd [#allocation4], 0
      %s778 = sshll.u32 %s2, 4
      %s779 = int_to_ptr.vmem [resolvable:$true] %s778
      %781 = dma.smem_to_vmem [#allocation7], 16, %s779, [#allocation4]
    $region21: #{sequential_grid_loss.1} parent=1 // pred_fallthru
      _
    // Predicated region
    $region22: #{sequential_grid_loss.1} parent=1 // pred_check
      _
    $region23: #{sequential_grid_loss.1} parent=1 // pred_check_branch
      %783 = sbr.rel (0) target = $region25
    $region24: #{sequential_grid_loss.1} parent=1 // pred_region
      %785 = dma.done [#allocation4], 16
    $region25: #{sequential_grid_loss.1} parent=1 // pred_fallthru
      _
    %786 = sfence
    %787 = vsyncpa [#allocation3], 1
    %788 = vsyncpa [#allocation6], 1
    %789 = vsyncpa [#allocation4], 1

</llo_original>
